<compile_context>
chip_gen: v5e
topology: v5e:2x2
jax: 0.10.0
libtpu: 0.0.40
codegen_flags: <defaults>
</compile_context>

<pallas_src>
import functools

import jax
import jax.numpy as jnp
from jax import lax
from jax.experimental import pallas as pl
from jax.experimental.pallas import tpu as pltpu


def _round_up(v, m):
    return (v + m - 1) // m * m


def _center_loss_kernel(x_ref, c_ref, csq_ref, lab_ref, out_ref, acc_ref, *,
                        batch, num_classes, tb, tc):
    b = pl.program_id(0)
    c = pl.program_id(1)

    @pl.when(c == 0)
    def _init():
        acc_ref[...] = jnp.zeros_like(acc_ref)

    x_raw = x_ref[...]                                    # (TB, D), input dtype
    x_f32 = x_raw.astype(jnp.float32)
    cen = c_ref[...]                                      # (TC, D), input dtype
    csq = csq_ref[...]                                    # (1, TC)  f32 (hoisted)
    labels = lab_ref[...]                                 # (TB, 1)  i32

    # ||x_i||^2 in f32.
    xsq = jnp.sum(x_f32 * x_f32, axis=1, keepdims=True)   # (TB, 1)

    # x @ centers.T on the MXU, f32 accumulation.
    xc = lax.dot_general(
        x_raw, cen,
        dimension_numbers=(((1,), (1,)), ((), ())),
        preferred_element_type=jnp.float32,
    )                                                      # (TB, TC)

    distmat = xsq + csq - 2.0 * xc                         # (TB, TC) f32

    # Global row / class indices for this tile (masks out padding exactly).
    col = c * tc + lax.broadcasted_iota(jnp.int32, (tb, tc), 1)
    row = b * tb + lax.broadcasted_iota(jnp.int32, (tb, tc), 0)
    hit = labels == col                                    # (TB, TC) bool
    valid = (col < num_classes) & (row < batch)

    # Reference: dist = distmat*mask; clamp(1e-12, 1e12).  Hit -> clamp(distmat),
    # miss -> 1e-12, padding -> 0.
    clamped = jnp.clip(distmat, 1e-12, 1e12)
    contrib = jnp.where(valid,
                        jnp.where(hit, clamped, jnp.float32(1e-12)),
                        jnp.float32(0.0))

    # Two-stage reduce: lanes now, sublanes once at the end.
    acc_ref[...] += jnp.sum(contrib, axis=1, keepdims=True)

    @pl.when(c == pl.num_programs(1) - 1)
    def _finalize():
        total = jnp.sum(acc_ref[...], axis=0, keepdims=True)   # (1, 1)
        out_ref[...] = jnp.broadcast_to(total, (1, 128))        # lane-dense store


def center_loss(x, centers, labels, *, tb_max=256, tc_max=512):
    """x: (B, D), centers: (C, D), labels: (B,) int -> scalar f32 loss."""
    B, D = x.shape
    C, Dc = centers.shape
    assert D == Dc, "feature dims must match"

    centers = centers.astype(x.dtype)
    labels = labels.astype(jnp.int32)

    TB = min(tb_max, _round_up(B, 8))
    TC = min(tc_max, _round_up(C, 128))
    B_pad = _round_up(B, TB)
    C_pad = _round_up(C, TC)
    nb = B_pad // TB
    nc = C_pad // TC

    x_p = jnp.pad(x, ((0, B_pad - B), (0, 0)))
    c_p = jnp.pad(centers, ((0, C_pad - C), (0, 0)))
    lab_p = jnp.pad(labels, (0, B_pad - B)).reshape(B_pad, 1)
    # Hoisted ||c_j||^2 as a (1, C_pad) f32 row (classes on lanes).
    csq = jnp.sum(c_p.astype(jnp.float32) ** 2, axis=1)[None, :]

    kernel = functools.partial(_center_loss_kernel,
                               batch=B, num_classes=C, tb=TB, tc=TC)

    partials = pl.pallas_call(
        kernel,
        out_shape=jax.ShapeDtypeStruct((1, nb * 128), jnp.float32),
        grid=(nb, nc),
        in_specs=[
            pl.BlockSpec((TB, D), lambda b, c: (b, 0)),   # x tile
            pl.BlockSpec((TC, D), lambda b, c: (c, 0)),   # centers tile
            pl.BlockSpec((1, TC), lambda b, c: (0, c)),   # ||c||^2 tile
            pl.BlockSpec((TB, 1), lambda b, c: (b, 0)),   # labels tile
        ],
        out_specs=pl.BlockSpec((1, 128), lambda b, c: (0, b)),
        scratch_shapes=[pltpu.VMEM((TB, 1), jnp.float32)],
        compiler_params=pltpu.CompilerParams(
            dimension_semantics=("parallel", "arbitrary"),
            vmem_limit_bytes=32 * 1024 * 1024,
        ),
    )(x_p, c_p, csq, lab_p)

    per_tile = partials.reshape(nb, 128)[:, 0]   # one partial per batch tile
    return jnp.sum(per_tile) / jnp.float32(B)


def _reference(x, centers, labels):
    B, C = x.shape[0], centers.shape[0]
    xf = x.astype(jnp.float32)
    cf = centers.astype(jnp.float32)
    distmat = (jnp.sum(xf * xf, axis=1, keepdims=True)
               + jnp.sum(cf * cf, axis=1)[None, :]
               - 2.0 * xf @ cf.T)
    mask = (labels[:, None] == jnp.arange(C)[None, :]).astype(jnp.float32)
    return jnp.clip(distmat * mask, 1e-12, 1e12).sum() / B


if __name__ == "__main__":
    key = jax.random.PRNGKey(0)
    k_c, k_x, k_l, k2_c, k2_x, k2_l = jax.random.split(key, 6)

    # Toy shapes matching the module defaults (num_classes=10, feat_dim=2).
    num_classes, feat_dim, batch = 10, 2, 8
    centers = jax.random.normal(k_c, (num_classes, feat_dim), dtype=jnp.float32)
    x = jax.random.normal(k_x, (batch, feat_dim), dtype=jnp.float32)
    labels = jax.random.randint(k_l, (batch,), 0, num_classes, dtype=jnp.int32)

    loss = jax.block_until_ready(center_loss(x, centers, labels))
    ref = _reference(x, centers, labels)
    assert jnp.allclose(loss, ref, rtol=1e-5, atol=1e-5), (loss, ref)

    # Larger case exercising multi-tile grid + row/column padding + reduction.
    C2, D2, B2 = 600, 64, 300
    centers2 = jax.random.normal(k2_c, (C2, D2), dtype=jnp.float32)
    x2 = jax.random.normal(k2_x, (B2, D2), dtype=jnp.float32)
    labels2 = jax.random.randint(k2_l, (B2,), 0, C2, dtype=jnp.int32)

    loss2 = jax.block_until_ready(center_loss(x2, centers2, labels2))
    ref2 = _reference(x2, centers2, labels2)
    assert jnp.allclose(loss2, ref2, rtol=2e-3, atol=1e-3), (loss2, ref2)

    print("KERNEL_OK")
</pallas_src>

<mosaic_0001>
module attributes {stable_mosaic.version = 11 : i64} {
  func.func @_center_loss_kernel(%arg0: i32, %arg1: i32, %arg2: memref<8x2xf32, #tpu.memory_space<vmem>>, %arg3: memref<128x2xf32, #tpu.memory_space<vmem>>, %arg4: memref<1x128xf32, #tpu.memory_space<vmem>>, %arg5: memref<8x1xi32, #tpu.memory_space<vmem>>, %arg6: memref<1x128xf32, #tpu.memory_space<vmem>>, %arg7: memref<8x1xf32, #tpu.memory_space<vmem>>) attributes {dimension_semantics = [#tpu.dimension_semantics<parallel>, #tpu.dimension_semantics<arbitrary>], iteration_bounds = array<i64: 1, 1>, scalar_prefetch = 0 : i64, scratch_operands = 1 : i64, tpu.core_type = #tpu.core_type<tc>, window_params = [{transform_indices = @transform_0, window_bounds = array<i64: 8, 2>}, {transform_indices = @transform_1, window_bounds = array<i64: 128, 2>}, {transform_indices = @transform_2, window_bounds = array<i64: 1, 128>}, {transform_indices = @transform_3, window_bounds = array<i64: 8, 1>}, {transform_indices = @transform_4, window_bounds = array<i64: 1, 128>}]} {
    %c0_i32 = arith.constant 0 : i32
    %0 = arith.cmpi eq, %arg1, %c0_i32 : i32
    %1 = arith.extui %0 : i1 to i32
    %c0_i32_0 = arith.constant 0 : i32
    %2 = arith.cmpi ne, %1, %c0_i32_0 : i32
    scf.if %2 {
      %cst_22 = arith.constant 0.000000e+00 : f32
      %48 = vector.broadcast %cst_22 : f32 to vector<8x1xf32>
      %c0_23 = arith.constant 0 : index
      %c0_24 = arith.constant 0 : index
      %49 = vector.load %arg7[%c0_23, %c0_24] : memref<8x1xf32, #tpu.memory_space<vmem>>, vector<8x1xf32>
      tpu.vector_store %arg7[%c0_23, %c0_24], %48 {strides = array<i32>} : memref<8x1xf32, #tpu.memory_space<vmem>>, vector<8x1xf32>,
    } else {
    }
    %c0 = arith.constant 0 : index
    %c0_1 = arith.constant 0 : index
    %3 = vector.load %arg2[%c0, %c0_1] : memref<8x2xf32, #tpu.memory_space<vmem>>, vector<8x2xf32>
    %c0_2 = arith.constant 0 : index
    %c0_3 = arith.constant 0 : index
    %4 = vector.load %arg3[%c0_2, %c0_3] : memref<128x2xf32, #tpu.memory_space<vmem>>, vector<128x2xf32>
    %c0_4 = arith.constant 0 : index
    %c0_5 = arith.constant 0 : index
    %5 = vector.load %arg4[%c0_4, %c0_5] : memref<1x128xf32, #tpu.memory_space<vmem>>, vector<1x128xf32>
    %c0_6 = arith.constant 0 : index
    %c0_7 = arith.constant 0 : index
    %6 = vector.load %arg5[%c0_6, %c0_7] : memref<8x1xi32, #tpu.memory_space<vmem>>, vector<8x1xi32>
    %7 = arith.mulf %3, %3 : vector<8x2xf32>
    %cst = arith.constant dense<0.000000e+00> : vector<8xf32>
    %8 = vector.multi_reduction <add>, %7, %cst [1] : vector<8x2xf32> to vector<8xf32>
    %9 = vector.shape_cast %8 : vector<8xf32> to vector<8x1xf32>
    %cst_8 = arith.constant dense<0.000000e+00> : vector<8x128xf32>
    %10 = tpu.matmul %3, %4, %cst_8 {dimension_numbers = #tpu.dot_dimension_numbers<[1], [1], [0], [0], [0, 0, 1, 0], [], []>} : vector<8x2xf32>, vector<128x2xf32>, vector<8x128xf32> -> vector<8x128xf32>
    %11 = vector.broadcast %9 : vector<8x1xf32> to vector<8x128xf32>
    %12 = vector.broadcast %5 : vector<1x128xf32> to vector<8x128xf32>
    %13 = arith.addf %11, %12 : vector<8x128xf32>
    %cst_9 = arith.constant 2.000000e+00 : f32
    %14 = vector.broadcast %cst_9 : f32 to vector<8x128xf32>
    %15 = arith.mulf %14, %10 : vector<8x128xf32>
    %16 = arith.subf %13, %15 : vector<8x128xf32>
    %c128_i32 = arith.constant 128 : i32
    %17 = arith.muli %arg1, %c128_i32 : i32
    %18 = tpu.iota {dimensions = array<i32: 1>} : vector<8x128xi32>
    %19 = vector.broadcast %17 : i32 to vector<8x128xi32>
    %20 = arith.addi %19, %18 : vector<8x128xi32>
    %c8_i32 = arith.constant 8 : i32
    %21 = arith.muli %arg0, %c8_i32 : i32
    %22 = tpu.iota {dimensions = array<i32: 0>} : vector<8x128xi32>
    %23 = vector.broadcast %21 : i32 to vector<8x128xi32>
    %24 = arith.addi %23, %22 : vector<8x128xi32>
    %25 = vector.broadcast %6 : vector<8x1xi32> to vector<8x128xi32>
    %26 = arith.cmpi eq, %25, %20 : vector<8x128xi32>
    %c10_i32 = arith.constant 10 : i32
    %27 = vector.broadcast %c10_i32 : i32 to vector<8x128xi32>
    %28 = arith.cmpi slt, %20, %27 : vector<8x128xi32>
    %c8_i32_10 = arith.constant 8 : i32
    %29 = vector.broadcast %c8_i32_10 : i32 to vector<8x128xi32>
    %30 = arith.cmpi slt, %24, %29 : vector<8x128xi32>
    %31 = arith.andi %28, %30 : vector<8x128xi1>
    %cst_11 = arith.constant 9.99999996E-13 : f32
    %cst_12 = arith.constant 9.99999995E+11 : f32
    %32 = vector.broadcast %cst_11 : f32 to vector<8x128xf32>
    %33 = arith.maximumf %32, %16 : vector<8x128xf32>
    %34 = vector.broadcast %cst_12 : f32 to vector<8x128xf32>
    %35 = arith.minimumf %34, %33 : vector<8x128xf32>
    %cst_13 = arith.constant 9.99999996E-13 : f32
    %36 = vector.broadcast %cst_13 : f32 to vector<8x128xf32>
    %37 = arith.select %26, %35, %36 : vector<8x128xi1>, vector<8x128xf32>
    %cst_14 = arith.constant 0.000000e+00 : f32
    %38 = vector.broadcast %cst_14 : f32 to vector<8x128xf32>
    %39 = arith.select %31, %37, %38 : vector<8x128xi1>, vector<8x128xf32>
    %c0_15 = arith.constant 0 : index
    %c0_16 = arith.constant 0 : index
    %40 = vector.load %arg7[%c0_15, %c0_16] : memref<8x1xf32, #tpu.memory_space<vmem>>, vector<8x1xf32>
    %cst_17 = arith.constant dense<0.000000e+00> : vector<8xf32>
    %41 = vector.multi_reduction <add>, %39, %cst_17 [1] : vector<8x128xf32> to vector<8xf32>
    %42 = vector.shape_cast %41 : vector<8xf32> to vector<8x1xf32>
    %43 = arith.addf %40, %42 : vector<8x1xf32>
    %c0_18 = arith.constant 0 : index
    %c0_19 = arith.constant 0 : index
    %44 = vector.load %arg7[%c0_18, %c0_19] : memref<8x1xf32, #tpu.memory_space<vmem>>, vector<8x1xf32>
    tpu.vector_store %arg7[%c0_18, %c0_19], %43 {strides = array<i32>} : memref<8x1xf32, #tpu.memory_space<vmem>>, vector<8x1xf32>,
    %c0_i32_20 = arith.constant 0 : i32
    %45 = arith.cmpi eq, %arg1, %c0_i32_20 : i32
    %46 = arith.extui %45 : i1 to i32
    %c0_i32_21 = arith.constant 0 : i32
    %47 = arith.cmpi ne, %46, %c0_i32_21 : i32
    scf.if %47 {
      %c0_22 = arith.constant 0 : index
      %c0_23 = arith.constant 0 : index
      %48 = vector.load %arg7[%c0_22, %c0_23] : memref<8x1xf32, #tpu.memory_space<vmem>>, vector<8x1xf32>
      %cst_24 = arith.constant dense<0.000000e+00> : vector<1xf32>
      %49 = vector.multi_reduction <add>, %48, %cst_24 [0] : vector<8x1xf32> to vector<1xf32>
      %50 = vector.shape_cast %49 : vector<1xf32> to vector<1x1xf32>
      %51 = vector.shape_cast %50 : vector<1x1xf32> to vector<1x1xf32>
      %52 = vector.broadcast %51 : vector<1x1xf32> to vector<1x128xf32>
      %c0_25 = arith.constant 0 : index
      %c0_26 = arith.constant 0 : index
      %53 = vector.load %arg6[%c0_25, %c0_26] : memref<1x128xf32, #tpu.memory_space<vmem>>, vector<1x128xf32>
      tpu.vector_store %arg6[%c0_25, %c0_26], %52 {strides = array<i32>} : memref<1x128xf32, #tpu.memory_space<vmem>>, vector<1x128xf32>,
    } else {
    }
    return
  }
  func.func @transform_0(%arg0: i32, %arg1: i32) -> (i32, i32) {
    %c0_i32 = arith.constant 0 : i32
    %c0_i32_0 = arith.constant 0 : i32
    return %arg0, %c0_i32 : i32, i32
  }
  func.func @transform_1(%arg0: i32, %arg1: i32) -> (i32, i32) {
    %c0_i32 = arith.constant 0 : i32
    %c0_i32_0 = arith.constant 0 : i32
    return %arg1, %c0_i32 : i32, i32
  }
  func.func @transform_2(%arg0: i32, %arg1: i32) -> (i32, i32) {
    %c0_i32 = arith.constant 0 : i32
    %c0_i32_0 = arith.constant 0 : i32
    return %c0_i32, %arg1 : i32, i32
  }
  func.func @transform_3(%arg0: i32, %arg1: i32) -> (i32, i32) {
    %c0_i32 = arith.constant 0 : i32
    %c0_i32_0 = arith.constant 0 : i32
    return %arg0, %c0_i32 : i32, i32
  }
  func.func @transform_4(%arg0: i32, %arg1: i32) -> (i32, i32) {
    %c0_i32 = arith.constant 0 : i32
    %c0_i32_0 = arith.constant 0 : i32
    return %c0_i32, %arg0 : i32, i32
  }
}

</mosaic_0001>

<llo_original>
// kernel: tpu_custom_call.1
$region0: #{tpu_custom_call.1}
  #allocation0 [shape = 'u32[]', space=smem, size = 0x4, offset = 0x4, fixed_abs, tag = 'smem constant byte address 0x4 - core index']
  #allocation1 [shape = 'u32[72,128]{1,0:T(1,128)}', space=vmem, size = 0x9000, scoped, tag = 'internal scratch']
  #allocation2 [shape = 'f32[8,1]{1,0:T(8,128)}', space=vmem, size = 0x1000, scoped, tag = 'scratch operand']
  %s0 = inlined_call_operand.vmem [shape: f32[8,2], index: 0, kind: input, shape index: {}]
  %s1 = inlined_call_operand.vmem [shape: f32[128,2], index: 1, kind: input, shape index: {}]
  %s2 = inlined_call_operand.vmem [shape: f32[1,128], index: 2, kind: input, shape index: {}]
  %s3 = inlined_call_operand.vmem [shape: s32[8,1], index: 3, kind: input, shape index: {}]
  %s4 = inlined_call_operand.hbm [shape: f32[1,128], index: 4, kind: output, shape index: {}]
  %s5 = sld [smem:[#allocation0]]
  $region34: #{tpu_custom_call.1} parent=0
    _
  %s7 = ssub.s32 1, %s5
  %s8 = scalar_select 0, %s7, %s5
  $region1: #{tpu_custom_call.1} parent=0
    #allocation3 [shape = 'u8[512]{0}', space=vmem, size = 0x400, scoped, tag = 'output window, operand 0, single buffered']
    #allocation4 [shape = 's32[1]{0}', space=sflag, size = 0x4, scoped, tag = 'scoped memory for tpu_custom_call.1']
    %9 = vsyncpa [#allocation4], 0
    // Predicated region
    $region2: #{tpu_custom_call.1} parent=1 // pred_check
      _
    $region3: #{tpu_custom_call.1} parent=1 // pred_check_branch
      %11 = sbr.rel (0) target = $region5
    $region4: #{tpu_custom_call.1} parent=1 // pred_region
      _
    $region5: #{tpu_custom_call.1} parent=1 // pred_fallthru
      _
    // Predicated region
    $region6: #{tpu_custom_call.1} parent=1 // pred_check
      _
    $region7: #{tpu_custom_call.1} parent=1 // pred_check_branch
      %13 = sbr.rel (0) target = $region9
    $region8: #{tpu_custom_call.1} parent=1 // pred_region
      _
    $region9: #{tpu_custom_call.1} parent=1 // pred_fallthru
      _
    // Predicated region
    $region10: #{tpu_custom_call.1} parent=1 // pred_check
      _
    $region11: #{tpu_custom_call.1} parent=1 // pred_check_branch
      %15 = sbr.rel (0) target = $region13
    $region12: #{tpu_custom_call.1} parent=1 // pred_region
      _
    $region13: #{tpu_custom_call.1} parent=1 // pred_fallthru
      _
    // Predicated region
    $region14: #{tpu_custom_call.1} parent=1 // pred_check
      _
    $region15: #{tpu_custom_call.1} parent=1 // pred_check_branch
      %17 = sbr.rel (0) target = $region17
    $region16: #{tpu_custom_call.1} parent=1 // pred_region
      _
    $region17: #{tpu_custom_call.1} parent=1 // pred_fallthru
      _
    %p18 = scmp.eq.s32.totalorder 0, 0
    // Predicated region
    $region18: #{tpu_custom_call.1} parent=1 // pred_check
      %p19 = pneg %p18
    $region19: #{tpu_custom_call.1} parent=1 // pred_check_branch
      %21 = sbr.rel (%p19) target = $region21
    $region20: #{tpu_custom_call.1} parent=1 // pred_region
      %vm22 = vcmask 7168
      %23 = vst.msk [vmem:[#allocation2] sm:$0xff] %vm22, 0.0
    $region21: #{tpu_custom_call.1} parent=1 // pred_fallthru
      _
    %v24 = vld [vmem:[%s0] sm:$0xff]
    %v25 = vld [vmem:[%s1] sm:$0xff]
    %v26 = vld [vmem:[%s1 + $0x8] sm:$0xff]
    %v27 = vld [vmem:[%s1 + $0x10] sm:$0xff]
    %v28 = vld [vmem:[%s1 + $0x18] sm:$0xff]
    %v29 = vld [vmem:[%s1 + $0x20] sm:$0xff]
    %v30 = vld [vmem:[%s1 + $0x28] sm:$0xff]
    %v31 = vld [vmem:[%s1 + $0x30] sm:$0xff]
    %v32 = vld [vmem:[%s1 + $0x38] sm:$0xff]
    %v33 = vld [vmem:[%s1 + $0x40] sm:$0xff]
    %v34 = vld [vmem:[%s1 + $0x48] sm:$0xff]
    %v35 = vld [vmem:[%s1 + $0x50] sm:$0xff]
    %v36 = vld [vmem:[%s1 + $0x58] sm:$0xff]
    %v37 = vld [vmem:[%s1 + $0x60] sm:$0xff]
    %v38 = vld [vmem:[%s1 + $0x68] sm:$0xff]
    %v39 = vld [vmem:[%s1 + $0x70] sm:$0xff]
    %v40 = vld [vmem:[%s1 + $0x78] sm:$0xff]
    %v41 = vld [vmem:[%s2] sm:$0x1]
    %v42 = vld [vmem:[%s3] sm:$0xff]
    %v43 = vmul.f32 %v24, %v24
    %vm44 = vcmask 15360
    %v45 = vsel %vm44, %v43, 0.0
    %46 = vadd.xlane.f32.xlu0 %v45
    %v47 = vpop.xlane.xlu0 %46
    %v49 = vsel %vm44, %v24, 0
    %v52 = vsel %vm44, %v25, 0
    %v55 = vsel %vm44, %v26, 0
    %v58 = vsel %vm44, %v27, 0
    %v61 = vsel %vm44, %v28, 0
    %v64 = vsel %vm44, %v29, 0
    %v67 = vsel %vm44, %v30, 0
    %v70 = vsel %vm44, %v31, 0
    %v73 = vsel %vm44, %v32, 0
    %v76 = vsel %vm44, %v33, 0
    %v79 = vsel %vm44, %v34, 0
    %v82 = vsel %vm44, %v35, 0
    %v85 = vsel %vm44, %v36, 0
    %v88 = vsel %vm44, %v37, 0
    %v91 = vsel %vm44, %v38, 0
    %v94 = vsel %vm44, %v39, 0
    %v97 = vsel %vm44, %v40, 0
    %99 = vmatpush.xpose.msra.mxu0 %v97
    %100 = vmatpush.xpose.msra.mxu0 %v94
    %101 = vmatpush.xpose.msra.mxu0 %v91
    %102 = vmatpush.xpose.msra.mxu0 %v88
    %103 = vmatpush.xpose.msra.mxu0 %v85
    %104 = vmatpush.xpose.msra.mxu0 %v82
    %105 = vmatpush.xpose.msra.mxu0 %v79
    %106 = vmatpush.xpose.msra.mxu0 %v76
    %107 = vmatpush.xpose.msra.mxu0 %v73
    %108 = vmatpush.xpose.msra.mxu0 %v70
    %109 = vmatpush.xpose.msra.mxu0 %v67
    %110 = vmatpush.xpose.msra.mxu0 %v64
    %111 = vmatpush.xpose.msra.mxu0 %v61
    %112 = vmatpush.xpose.msra.mxu0 %v58
    %113 = vmatpush.xpose.msra.mxu0 %v55
    %114 = vmatpush.xpose.msra.mxu0 %v52
    %115 = vmatmul.f32.gmra.mxu0 %v49
    %v116 = vpop.f32.mrf.mxu0
    %v117 = vadd.f32 0.0, %v116
    %118 = vdwg.mxu0
    %v120 = vperm.slane %v41, 0
    %v122 = vadd.f32 %v47, %v120
    %v123 = vmul.f32 %v117, 2.0
    %v124 = vsub.f32 %v122, %v123
    %s125 = smul.u32 0, 128
    %v126 = vlaneseq
    %v127 = vand.u32 %v126, 127
    %v128 = vstv %s125
    %v129 = vadd.s32 %v128, %v127
    %s130 = smul.u32 0, 8
    %v131 = vlaneseq
    %v132 = vshrl.u32 %v131, 7
    %v133 = vstv %s130
    %v134 = vadd.s32 %v133, %v132
    %135 = vset.pattern.permute.xlu0 0
    %136 = vperm.xlu0 %135, %v42
    %v137 = vpop.permute.xlu0 %136
    %vm138 = vcmp.eq.s32.totalorder %v137, %v129
    %vm139 = vcmp.lt.s32.totalorder %v129, 10
    %vm140 = vcmp.lt.s32.totalorder %v134, 8
    %vm141 = vmand %vm139, %vm140
    %v142 = vmax.f32 %v124, 1e-12
    %v143 = vmin.f32 %v142, 1e+12
    %v144 = vsel %vm138, %v143, 1e-12
    %v145 = vsel %vm141, %v144, 0.0
    %v146 = vld [vmem:[#allocation2] sm:$0xff]
    %147 = vadd.xlane.f32.xlu0 %v145
    %v148 = vpop.xlane.xlu0 %147
    %v149 = vadd.f32 %v146, %v148
    %vm150 = vcmask 7168
    %151 = vst.msk [vmem:[#allocation2] sm:$0xff] %vm150, %v149
    // Predicated region
    $region22: #{tpu_custom_call.1} parent=1 // pred_check
      %p152 = pneg %p18
    $region23: #{tpu_custom_call.1} parent=1 // pred_check_branch
      %154 = sbr.rel (%p152) target = $region25
    $region24: #{tpu_custom_call.1} parent=1 // pred_region
      %v155 = vld [vmem:[#allocation2] sm:$0xff]
      %v156 = vsel %vm150, %v155, 0.0
      %v157 = vrot.slane %v156, 4
      %v158 = vadd.f32 %v156, %v157
      %v159 = vrot.slane %v158, 2
      %v160 = vadd.f32 %v158, %v159
      %v161 = vrot.slane %v160, 1
      %v162 = vadd.f32 %v160, %v161
      %164 = vset.pattern.permute.xlu0 0
      %165 = vperm.xlu0 %164, %v162
      %v166 = vpop.permute.xlu0 %165
      %168 = vst [vmem:[#allocation3] sm:$0x1] %v166
    $region25: #{tpu_custom_call.1} parent=1 // pred_fallthru
      _
    // Predicated region
    $region26: #{tpu_custom_call.1} parent=1 // pred_check
      _
    $region27: #{tpu_custom_call.1} parent=1 // pred_check_branch
      %170 = sbr.rel (0) target = $region29
    $region28: #{tpu_custom_call.1} parent=1 // pred_region
      %172 = vsyncadd [#allocation4], 0
      %s174 = sshll.u32 [#allocation3], 4
      %s175 = int_to_ptr.vmem [resolvable:$true] %s174
      %s176 = sshll.u32 %s4, 4
      %s177 = int_to_ptr.hbm [resolvable:$true] %s176
      %179 = dma.vmem_to_hbm [thread:$0]  %s175, 16, %s177, [#allocation4]
    $region29: #{tpu_custom_call.1} parent=1 // pred_fallthru
      _
    // Predicated region
    $region30: #{tpu_custom_call.1} parent=1 // pred_check
      _
    $region31: #{tpu_custom_call.1} parent=1 // pred_check_branch
      %181 = sbr.rel (0) target = $region33
    $region32: #{tpu_custom_call.1} parent=1 // pred_region
      %183 = dma.done [#allocation4], 16
    $region33: #{tpu_custom_call.1} parent=1 // pred_fallthru
      _
    %184 = vsyncpa [#allocation4], 1

</llo_original>
